<compile_context>
chip_gen: v7x
topology: tpu7x:2x2x1
jax: 0.10.0
libtpu: 0.0.40
codegen_flags: <defaults>
</compile_context>

<pallas_src>
import functools
import math

import jax
import jax.numpy as jnp
from jax import lax
from jax.experimental import pallas as pl
from jax.experimental.pallas import tpu as pltpu


def _vmem_limit_bytes():
    try:
        cap = pltpu.get_tpu_info().vmem_capacity_bytes
        return int(min(cap * 3 // 4, 100 * 1024 * 1024))
    except Exception:
        return 48 * 1024 * 1024


_VMEM_LIMIT = _vmem_limit_bytes()
_ACT_DTYPE = jnp.bfloat16          # inter-kernel activation dtype
_LN_EPS = 1e-12


def _pick_tile(dim, target, align):
    """Largest tile <= target that divides dim and is a multiple of align,
    falling back to the full dim (always legal for BlockSpec)."""
    if dim <= target:
        return dim
    if dim % align != 0:
        return dim
    t = (target // align) * align
    while t >= align:
        if dim % t == 0:
            return t
        t -= align
    return dim


# --------------------------- dense (Linear), resident weight ---------------------------

def _dense_kernel(x_ref, w_ref, b_ref, o_ref, *, activation):
    y = jnp.dot(x_ref[...], w_ref[...], preferred_element_type=jnp.float32) + b_ref[...]
    if activation == "gelu":
        # TODO(synk): HF BERT default is exact erf-GELU; tanh approximation used.
        y = jax.nn.gelu(y, approximate=True)
    elif activation == "tanh":
        y = jnp.tanh(y)
    o_ref[...] = y.astype(o_ref.dtype)


def dense(x, w, b, activation="none", *, tm=512):
    """PyTorch nn.Linear semantics with pre-transposed, VMEM-resident weight.
    x:(M,K) bf16, w:(K,N) bf16, b:(N,) fp32  ->  (M,N) bf16."""
    M, K = x.shape
    Kw, N = w.shape
    assert K == Kw
    tm = _pick_tile(M, tm, 8)
    return pl.pallas_call(
        functools.partial(_dense_kernel, activation=activation),
        out_shape=jax.ShapeDtypeStruct((M, N), _ACT_DTYPE),
        grid=(M // tm,),
        in_specs=[
            pl.BlockSpec((tm, K), lambda i: (i, 0)),
            pl.BlockSpec((K, N), lambda i: (0, 0)),    # weight resident across grid
            pl.BlockSpec((1, N), lambda i: (0, 0)),
        ],
        out_specs=pl.BlockSpec((tm, N), lambda i: (i, 0)),
        compiler_params=pltpu.CompilerParams(
            dimension_semantics=("parallel",),
            vmem_limit_bytes=_VMEM_LIMIT),
    )(x, w, b.reshape(1, N))


# ------------------- dense + residual add + LayerNorm (fused epilogue) -------------------

def _dense_add_ln_kernel(x_ref, w_ref, b_ref, r_ref, g_ref, bb_ref, o_ref, *, eps):
    y = jnp.dot(x_ref[...], w_ref[...], preferred_element_type=jnp.float32) + b_ref[...]
    y = y + r_ref[...].astype(jnp.float32)
    mean = jnp.mean(y, axis=-1, keepdims=True)
    yc = y - mean
    var = jnp.mean(yc * yc, axis=-1, keepdims=True)
    o_ref[...] = ((yc * lax.rsqrt(var + eps)) * g_ref[...] + bb_ref[...]).astype(o_ref.dtype)


def dense_add_ln(x, w, b, residual, gamma, beta, *, eps=_LN_EPS, tm=512):
    """LayerNorm(x @ w + b + residual) with the full (K, N) weight resident.
    x:(M,K) bf16, w:(K,N) bf16, residual:(M,N) bf16 -> (M,N) bf16."""
    M, K = x.shape
    Kw, N = w.shape
    assert K == Kw and residual.shape == (M, N)
    tm = _pick_tile(M, tm, 8)
    return pl.pallas_call(
        functools.partial(_dense_add_ln_kernel, eps=eps),
        out_shape=jax.ShapeDtypeStruct((M, N), _ACT_DTYPE),
        grid=(M // tm,),
        in_specs=[
            pl.BlockSpec((tm, K), lambda i: (i, 0)),
            pl.BlockSpec((K, N), lambda i: (0, 0)),
            pl.BlockSpec((1, N), lambda i: (0, 0)),
            pl.BlockSpec((tm, N), lambda i: (i, 0)),
            pl.BlockSpec((1, N), lambda i: (0, 0)),
            pl.BlockSpec((1, N), lambda i: (0, 0)),
        ],
        out_specs=pl.BlockSpec((tm, N), lambda i: (i, 0)),
        compiler_params=pltpu.CompilerParams(
            dimension_semantics=("parallel",),
            vmem_limit_bytes=_VMEM_LIMIT),
    )(x, w, b.reshape(1, N), residual, gamma.reshape(1, N), beta.reshape(1, N))


# ------------------------------- layer norm (embeddings) -------------------------------

def _ln_kernel(x_ref, g_ref, b_ref, o_ref, *, eps):
    x = x_ref[...].astype(jnp.float32)
    mean = jnp.mean(x, axis=-1, keepdims=True)
    xc = x - mean
    var = jnp.mean(xc * xc, axis=-1, keepdims=True)
    o_ref[...] = ((xc * lax.rsqrt(var + eps)) * g_ref[...] + b_ref[...]).astype(o_ref.dtype)


def layernorm(x, gamma, beta, *, eps=_LN_EPS, tm=512):
    M, H = x.shape
    tm = _pick_tile(M, tm, 8)
    return pl.pallas_call(
        functools.partial(_ln_kernel, eps=eps),
        out_shape=jax.ShapeDtypeStruct((M, H), _ACT_DTYPE),
        grid=(M // tm,),
        in_specs=[
            pl.BlockSpec((tm, H), lambda i: (i, 0)),
            pl.BlockSpec((1, H), lambda i: (0, 0)),
            pl.BlockSpec((1, H), lambda i: (0, 0)),
        ],
        out_specs=pl.BlockSpec((tm, H), lambda i: (i, 0)),
        compiler_params=pltpu.CompilerParams(
            dimension_semantics=("parallel",),
            vmem_limit_bytes=_VMEM_LIMIT),
    )(x, gamma.reshape(1, H), beta.reshape(1, H))


# ------------------------------------ attention ------------------------------------

def _attn_kernel(qkv_ref, m_ref, o_ref, *, n_heads, d_head, scale, group):
    # qkv_ref block: (1, S, 3H) bf16; m_ref block: (1, 1, S) fp32; o_ref: (1, S, H) bf16
    mask = m_ref[0]                                   # (1, S) additive
    H = n_heads * d_head
    gw = group * d_head                               # lane width of one head group
    for g in range(n_heads // group):                 # static unroll over head groups
        ctx = []
        for hh in range(group):
            lo = (g * group + hh) * d_head
            q = qkv_ref[0, :, lo:lo + d_head]                       # (S, dH) bf16
            k = qkv_ref[0, :, H + lo:H + lo + d_head]               # (S, dH) bf16
            v = qkv_ref[0, :, 2 * H + lo:2 * H + lo + d_head]       # (S, dH) bf16
            # NT-form contraction: no explicit K transpose (keeps XLU free for softmax).
            s = lax.dot_general(q, k, (((1,), (1,)), ((), ())),
                                preferred_element_type=jnp.float32)
            s = s * scale + mask
            s = s - jnp.max(s, axis=-1, keepdims=True)
            p = jnp.exp(s)
            p = p * pl.reciprocal(jnp.sum(p, axis=-1, keepdims=True), approx=True)
            ctx.append(jnp.dot(p.astype(v.dtype), v,
                               preferred_element_type=jnp.float32))
        merged = ctx[0] if group == 1 else jnp.concatenate(ctx, axis=-1)
        # one lane-aligned (S, group*d_head) store per head group
        o_ref[0, :, g * gw:(g + 1) * gw] = merged.astype(o_ref.dtype)


def attention(qkv, mask, n_heads):
    """qkv: (B, S, 3H) bf16 fused Q|K|V; mask: (B, 1, S) fp32 additive."""
    B, S, H3 = qkv.shape
    H = H3 // 3
    d_head = H // n_heads
    scale = 1.0 / math.sqrt(d_head)
    # group heads so each output store is >=128 lanes wide (e.g. 2 heads for d_head=64)
    group = min(n_heads, max(1, 128 // d_head)) if d_head <= 128 else 1
    while n_heads % group:
        group -= 1
    return pl.pallas_call(
        functools.partial(_attn_kernel, n_heads=n_heads, d_head=d_head,
                          scale=scale, group=group),
        out_shape=jax.ShapeDtypeStruct((B, S, H), _ACT_DTYPE),
        grid=(B,),
        in_specs=[
            pl.BlockSpec((1, S, H3), lambda b: (b, 0, 0)),
            pl.BlockSpec((1, 1, S), lambda b: (b, 0, 0)),
        ],
        out_specs=pl.BlockSpec((1, S, H), lambda b: (b, 0, 0)),
        compiler_params=pltpu.CompilerParams(
            dimension_semantics=("parallel",),
            vmem_limit_bytes=_VMEM_LIMIT),
    )(qkv, mask)


# ------------------------- pooler + classifier (fused, tiny) -------------------------

def _pool_cls_kernel(x_ref, pw_ref, pb_ref, cw_ref, cb_ref, o_ref):
    pooled = jnp.tanh(
        jnp.dot(x_ref[...], pw_ref[...], preferred_element_type=jnp.float32)
        + pb_ref[...])
    # dropout(p=0.3) on the pooled output is the identity at inference
    logits = jnp.dot(pooled.astype(cw_ref.dtype), cw_ref[...],
                     preferred_element_type=jnp.float32) + cb_ref[...]
    o_ref[...] = logits


def pooler_classifier(cls, pw, pb, cw, cb):
    """cls:(B,H) bf16, pw:(H,H) bf16, cw:(H,C) bf16 -> logits (B,C) fp32."""
    B, H = cls.shape
    _, C = cw.shape
    return pl.pallas_call(
        _pool_cls_kernel,
        out_shape=jax.ShapeDtypeStruct((B, C), jnp.float32),
        grid=(1,),
        in_specs=[
            pl.BlockSpec((B, H), lambda i: (0, 0)),
            pl.BlockSpec((H, H), lambda i: (0, 0)),
            pl.BlockSpec((1, H), lambda i: (0, 0)),
            pl.BlockSpec((H, C), lambda i: (0, 0)),
            pl.BlockSpec((1, C), lambda i: (0, 0)),
        ],
        out_specs=pl.BlockSpec((B, C), lambda i: (0, 0)),
    )(cls, pw, pb.reshape(1, H), cw, cb.reshape(1, C))


# ----------------------------- model (glue) -----------------------------

def init_params(key, cfg):
    H, I = cfg["hidden"], cfg["inter"]
    V, P, T = cfg["vocab"], cfg["max_pos"], cfg["type_vocab"]
    C, L = cfg["n_classes"], cfg["layers"]
    keys = iter(jax.random.split(key, 16 + 8 * L))

    def w(shape, dtype=jnp.bfloat16):
        # weights stored pre-transposed (in_features, out_features)
        return (jax.random.normal(next(keys), shape, jnp.float32) * 0.02).astype(dtype)

    z = lambda n: jnp.zeros((n,), jnp.float32)
    o = lambda n: jnp.ones((n,), jnp.float32)

    params = {
        "word_emb": w((V, H), jnp.float32),
        "pos_emb": w((P, H), jnp.float32),
        "type_emb": w((T, H), jnp.float32),
        "emb_ln_g": o(H), "emb_ln_b": z(H),
        "pool_w": w((H, H)), "pool_b": z(H),
        "cls_w": w((H, C)), "cls_b": z(C),
        "layers": [],
    }
    for _ in range(L):
        params["layers"].append({
            "qkv_w": w((H, 3 * H)), "qkv_b": z(3 * H),   # fused Q|K|V projection
            "ao_w": w((H, H)), "ao_b": z(H),
            "ao_ln_g": o(H), "ao_ln_b": z(H),
            "ff_i_w": w((H, I)), "ff_i_b": z(I),
            "ff_o_w": w((I, H)), "ff_o_b": z(H),
            "ff_ln_g": o(H), "ff_ln_b": z(H),
        })
    return params


def bert_sentiment_forward(params, input_ids, attention_mask, cfg):
    B, S = input_ids.shape
    H, nH = cfg["hidden"], cfg["heads"]

    # --- embeddings (table lookups are glue; LN is a row-tiled kernel, emits bf16) ---
    # TODO(synk): token_type_ids hard-coded to zeros (matches default BertModel call).
    pos_ids = jnp.arange(S)
    we = jnp.take(params["word_emb"], input_ids, axis=0)                  # (B,S,H)
    pe = jnp.take(params["pos_emb"], pos_ids, axis=0)[None]               # (1,S,H)
    te = jnp.take(params["type_emb"], jnp.zeros_like(input_ids), axis=0)  # (B,S,H)
    emb = (we + pe + te).reshape(B * S, H)
    x = layernorm(emb, params["emb_ln_g"], params["emb_ln_b"])            # (B*S,H) bf16

    # --- extended attention mask: (1 - m) * -10000, per-batch additive (B,1,S) ---
    ext = ((1.0 - attention_mask.astype(jnp.float32)) * -10000.0)[:, None, :]

    for lyr in params["layers"]:
        # fused QKV projection, then in-kernel per-head attention (no head transposes)
        qkv = dense(x, lyr["qkv_w"], lyr["qkv_b"])                        # (B*S, 3H) bf16
        ctx = attention(qkv.reshape(B, S, 3 * H), ext, nH)                # (B, S, H) bf16
        # attention output projection with residual-add + LayerNorm fused in
        x = dense_add_ln(ctx.reshape(B * S, H), lyr["ao_w"], lyr["ao_b"],
                         residual=x, gamma=lyr["ao_ln_g"], beta=lyr["ao_ln_b"])
        ffn = dense(x, lyr["ff_i_w"], lyr["ff_i_b"], activation="gelu")   # (B*S, I) bf16
        x = dense_add_ln(ffn, lyr["ff_o_w"], lyr["ff_o_b"],
                         residual=x, gamma=lyr["ff_ln_g"], beta=lyr["ff_ln_b"])

    # --- pooler on [CLS] + dropout(identity) + classifier, fused into one kernel ---
    cls = x.reshape(B, S, H)[:, 0, :]                                      # (B,H) bf16
    logits = pooler_classifier(cls, params["pool_w"], params["pool_b"],
                               params["cls_w"], params["cls_b"])           # (B,C) fp32
    return logits


if __name__ == "__main__":
    cfg = dict(vocab=100, hidden=32, heads=2, inter=64, layers=2,
               max_pos=16, type_vocab=2, n_classes=3)
    key = jax.random.PRNGKey(0)
    pkey, ikey = jax.random.split(key)
    params = init_params(pkey, cfg)

    B, S = 2, 8
    input_ids = jax.random.randint(ikey, (B, S), 0, cfg["vocab"], dtype=jnp.int32)
    attention_mask = jnp.array([[1, 1, 1, 1, 1, 1, 1, 1],
                                [1, 1, 1, 1, 1, 1, 0, 0]], dtype=jnp.int32)

    logits = bert_sentiment_forward(params, input_ids, attention_mask, cfg)
    jax.block_until_ready(logits)
    assert logits.shape == (B, cfg["n_classes"])
    print("KERNEL_OK")
</pallas_src>

<mosaic_0001>
module attributes {stable_mosaic.version = 11 : i64} {
  func.func @_ln_kernel(%arg0: i32, %arg1: memref<16x32xf32, #tpu.memory_space<vmem>>, %arg2: memref<1x32xf32, #tpu.memory_space<vmem>>, %arg3: memref<1x32xf32, #tpu.memory_space<vmem>>, %arg4: memref<16x32xbf16, #tpu.memory_space<vmem>>) attributes {dimension_semantics = [#tpu.dimension_semantics<parallel>], iteration_bounds = array<i64: 1>, scalar_prefetch = 0 : i64, scratch_operands = 0 : i64, tpu.core_type = #tpu.core_type<tc>, window_params = [{transform_indices = @transform_0, window_bounds = array<i64: 16, 32>}, {pipeline_mode = #tpu.pipeline_mode<synchronous>, transform_indices = @transform_1, window_bounds = array<i64: 1, 32>}, {pipeline_mode = #tpu.pipeline_mode<synchronous>, transform_indices = @transform_2, window_bounds = array<i64: 1, 32>}, {transform_indices = @transform_3, window_bounds = array<i64: 16, 32>}]} {
    %c0 = arith.constant 0 : index
    %c0_0 = arith.constant 0 : index
    %0 = vector.load %arg1[%c0, %c0_0] : memref<16x32xf32, #tpu.memory_space<vmem>>, vector<16x32xf32>
    %cst = arith.constant dense<0.000000e+00> : vector<16xf32>
    %1 = vector.multi_reduction <add>, %0, %cst [1] : vector<16x32xf32> to vector<16xf32>
    %2 = vector.shape_cast %1 : vector<16xf32> to vector<16x1xf32>
    %cst_1 = arith.constant 3.200000e+01 : f32
    %3 = vector.broadcast %cst_1 : f32 to vector<16x1xf32>
    %4 = arith.divf %2, %3 : vector<16x1xf32>
    %5 = vector.broadcast %4 : vector<16x1xf32> to vector<16x32xf32>
    %6 = arith.subf %0, %5 : vector<16x32xf32>
    %7 = arith.mulf %6, %6 : vector<16x32xf32>
    %cst_2 = arith.constant dense<0.000000e+00> : vector<16xf32>
    %8 = vector.multi_reduction <add>, %7, %cst_2 [1] : vector<16x32xf32> to vector<16xf32>
    %9 = vector.shape_cast %8 : vector<16xf32> to vector<16x1xf32>
    %cst_3 = arith.constant 3.200000e+01 : f32
    %10 = vector.broadcast %cst_3 : f32 to vector<16x1xf32>
    %11 = arith.divf %9, %10 : vector<16x1xf32>
    %cst_4 = arith.constant 9.99999996E-13 : f32
    %12 = vector.broadcast %cst_4 : f32 to vector<16x1xf32>
    %13 = arith.addf %11, %12 : vector<16x1xf32>
    %14 = math.rsqrt %13 : vector<16x1xf32>
    %15 = vector.broadcast %14 : vector<16x1xf32> to vector<16x32xf32>
    %16 = arith.mulf %6, %15 : vector<16x32xf32>
    %c0_5 = arith.constant 0 : index
    %c0_6 = arith.constant 0 : index
    %17 = vector.load %arg2[%c0_5, %c0_6] : memref<1x32xf32, #tpu.memory_space<vmem>>, vector<1x32xf32>
    %18 = vector.broadcast %17 : vector<1x32xf32> to vector<16x32xf32>
    %19 = arith.mulf %16, %18 : vector<16x32xf32>
    %c0_7 = arith.constant 0 : index
    %c0_8 = arith.constant 0 : index
    %20 = vector.load %arg3[%c0_7, %c0_8] : memref<1x32xf32, #tpu.memory_space<vmem>>, vector<1x32xf32>
    %21 = vector.broadcast %20 : vector<1x32xf32> to vector<16x32xf32>
    %22 = arith.addf %19, %21 : vector<16x32xf32>
    %23 = arith.truncf %22 : vector<16x32xf32> to vector<16x32xbf16>
    %c0_9 = arith.constant 0 : index
    %c0_10 = arith.constant 0 : index
    %24 = vector.load %arg4[%c0_9, %c0_10] : memref<16x32xbf16, #tpu.memory_space<vmem>>, vector<16x32xbf16>
    tpu.vector_store %arg4[%c0_9, %c0_10], %23 {strides = array<i32>} : memref<16x32xbf16, #tpu.memory_space<vmem>>, vector<16x32xbf16>,
    return
  }
  func.func @transform_0(%arg0: i32) -> (i32, i32) {
    %c0_i32 = arith.constant 0 : i32
    %c0_i32_0 = arith.constant 0 : i32
    return %arg0, %c0_i32 : i32, i32
  }
  func.func @transform_1(%arg0: i32) -> (i32, i32) {
    %c0_i32 = arith.constant 0 : i32
    %c0_i32_0 = arith.constant 0 : i32
    %c0_i32_1 = arith.constant 0 : i32
    return %c0_i32, %c0_i32_0 : i32, i32
  }
  func.func @transform_2(%arg0: i32) -> (i32, i32) {
    %c0_i32 = arith.constant 0 : i32
    %c0_i32_0 = arith.constant 0 : i32
    %c0_i32_1 = arith.constant 0 : i32
    return %c0_i32, %c0_i32_0 : i32, i32
  }
  func.func @transform_3(%arg0: i32) -> (i32, i32) {
    %c0_i32 = arith.constant 0 : i32
    %c0_i32_0 = arith.constant 0 : i32
    return %arg0, %c0_i32 : i32, i32
  }
}

</mosaic_0001>

<llo_original>
// kernel: tpu_custom_call.1
$region0: #{tpu_custom_call.1}
  #allocation0 [shape = 'u32[]', space=smem, size = 0x4, offset = 0x4, fixed_abs, tag = 'smem constant byte address 0x4 - core index']
  #allocation1 [shape = 'u32[144,128]{1,0:T(1,128)}', space=vmem, size = 0x12000, scoped, tag = 'internal scratch']
  %s0 = inlined_call_operand.hbm [shape: f32[16,32], index: 0, kind: input, shape index: {}]
  %s1 = inlined_call_operand.vmem [shape: f32[1,32], index: 1, kind: input, shape index: {}]
  %s2 = inlined_call_operand.vmem [shape: f32[1,32], index: 2, kind: input, shape index: {}]
  %s3 = inlined_call_operand.hbm [shape: bf16[16,32], index: 3, kind: output, shape index: {}]
  %s4 = sld [smem:[#allocation0]]
  $region26: #{tpu_custom_call.1} parent=0
    _
  %s6 = ssub.s32 1, %s4
  %s7 = scalar_select 0, %s6, %s4
  $region1: #{tpu_custom_call.1} parent=0
    #allocation2 [shape = 'u8[8192]{0}', space=vmem, size = 0x2000, scoped, tag = 'input window, operand 0, single buffered']
    #allocation3 [shape = 's32[1]{0}', space=sflag, size = 0x4, scoped, tag = 'scoped memory for tpu_custom_call.1']
    #allocation4 [shape = 's32[1]{0}', space=sflag, size = 0x4, scoped, tag = 'scoped memory for tpu_custom_call.1']
    #allocation5 [shape = 'u8[4096]{0}', space=vmem, size = 0x1000, scoped, tag = 'output window, operand 0, single buffered']
    %8 = vsyncpa [#allocation3], 0
    %9 = vsyncpa [#allocation4], 0
    // Predicated region
    $region2: #{tpu_custom_call.1} parent=1 // pred_check
      _
    $region3: #{tpu_custom_call.1} parent=1 // pred_check_branch
      %11 = sbr.rel (0) target = $region5
    $region4: #{tpu_custom_call.1} parent=1 // pred_region
      %s13 = ssub.s32 256, 256
      %14 = vsyncadd [#allocation3], %s13
      %s15 = sshll.u32 [#allocation2], 4
      %s16 = int_to_ptr.vmem [resolvable:$true] %s15
      %21 = dma.hbm_to_vmem [thread:$0]  %s0, 256, %s16, [#allocation3], 128, 128, 8
    $region5: #{tpu_custom_call.1} parent=1 // pred_fallthru
      _
    // Predicated region
    $region6: #{tpu_custom_call.1} parent=1 // pred_check
      _
    $region7: #{tpu_custom_call.1} parent=1 // pred_check_branch
      %23 = sbr.rel (0) target = $region9
    $region8: #{tpu_custom_call.1} parent=1 // pred_region
      _
    $region9: #{tpu_custom_call.1} parent=1 // pred_fallthru
      _
    // Predicated region
    $region10: #{tpu_custom_call.1} parent=1 // pred_check
      _
    $region11: #{tpu_custom_call.1} parent=1 // pred_check_branch
      %25 = sbr.rel (0) target = $region13
    $region12: #{tpu_custom_call.1} parent=1 // pred_region
      _
    $region13: #{tpu_custom_call.1} parent=1 // pred_fallthru
      _
    // Predicated region
    $region14: #{tpu_custom_call.1} parent=1 // pred_check
      _
    $region15: #{tpu_custom_call.1} parent=1 // pred_check_branch
      %27 = sbr.rel (0) target = $region17
    $region16: #{tpu_custom_call.1} parent=1 // pred_region
      %28 = dma.done [#allocation3], 256
    $region17: #{tpu_custom_call.1} parent=1 // pred_fallthru
      _
    %v29 = vld [vmem:[#allocation2] sm:$0xff]
    %v30 = vld [vmem:[#allocation2 + $0x8] sm:$0xff]
    %vm31 = vcmask 261120
    %v32 = vsel %vm31, %v29, 0.0
    %33 = vadd.xlane.f32.xlu0 %v32
    %v34 = vpop.xlane.xlu0 %33
    %v35 = vsel %vm31, %v30, 0.0
    %36 = vadd.xlane.f32.xlu0 %v35
    %v37 = vpop.xlane.xlu0 %36
    %v38 = vrcp.pop 32.0
    %v39 = vmul.f32 %v34, %v38
    %v40 = vmul.f32 %v37, %v38
    %v41 = vsub.f32 %v29, %v39
    %v42 = vsub.f32 %v30, %v40
    %v43 = vmul.f32 %v41, %v41
    %v44 = vmul.f32 %v42, %v42
    %v45 = vsel %vm31, %v43, 0.0
    %46 = vadd.xlane.f32.xlu0 %v45
    %v47 = vpop.xlane.xlu0 %46
    %v48 = vsel %vm31, %v44, 0.0
    %49 = vadd.xlane.f32.xlu0 %v48
    %v50 = vpop.xlane.xlu0 %49
    %v51 = vmul.f32 %v47, %v38
    %v52 = vmul.f32 %v50, %v38
    %v53 = vadd.f32 %v51, 1e-12
    %v54 = vadd.f32 %v52, 1e-12
    %v55 = vrsqrt.pop %v53
    %v56 = vrsqrt.pop %v54
    %v57 = vmul.f32 %v41, %v55
    %v58 = vmul.f32 %v42, %v56
    %v59 = vld [vmem:[%s1] sm:$0x1]
    %v61 = vlaneseq
    %v62 = vshrl.u32 %v61, 7
    %v63 = vsub.s32 0, %v62
    %v64 = vrot.slane %v59, %v63
    %v66 = vmul.f32 %v57, %v64
    %v67 = vmul.f32 %v58, %v64
    %v68 = vld [vmem:[%s2] sm:$0x1]
    %v70 = vlaneseq
    %v71 = vshrl.u32 %v70, 7
    %v72 = vsub.s32 0, %v71
    %v73 = vrot.slane %v68, %v72
    %v75 = vadd.f32 %v66, %v73
    %v76 = vadd.f32 %v67, %v73
    %v77 = vpack.c.bf16 %v76, %v75
    %v79 = vunpack.c.l.b16 %v77
    %v80 = vunpack.c.h.b16 %v77
    %v81 = vpack.c.b16 %v79, %v79
    %v82 = vpack.c.b16 %v80, %v80
    %vm85 = vcmask 257024
    %86 = vst.msk [vmem:[#allocation5] sm:$0xf] %vm85, %v81
    %87 = vst.msk [vmem:[#allocation5 + $0x4] sm:$0xf] %vm85, %v82
    // Predicated region
    $region18: #{tpu_custom_call.1} parent=1 // pred_check
      _
    $region19: #{tpu_custom_call.1} parent=1 // pred_check_branch
      %89 = sbr.rel (0) target = $region21
    $region20: #{tpu_custom_call.1} parent=1 // pred_region
      %s91 = ssub.s32 128, 128
      %92 = vsyncadd [#allocation4], %s91
      %s93 = sshll.u32 [#allocation5], 4
      %s94 = int_to_ptr.vmem [resolvable:$true] %s93
      %99 = dma.vmem_to_hbm [thread:$0]  %s94, 128, %s3, [#allocation4], 64, 64, 4
    $region21: #{tpu_custom_call.1} parent=1 // pred_fallthru
      _
    // Predicated region
    $region22: #{tpu_custom_call.1} parent=1 // pred_check
      _
    $region23: #{tpu_custom_call.1} parent=1 // pred_check_branch
      %101 = sbr.rel (0) target = $region25
    $region24: #{tpu_custom_call.1} parent=1 // pred_region
      %102 = dma.done [#allocation4], 128
    $region25: #{tpu_custom_call.1} parent=1 // pred_fallthru
      _
    %103 = vsyncpa [#allocation3], 1
    %104 = vsyncpa [#allocation4], 1

</llo_original>
